<compile_context>
chip_gen: v7x
topology: tpu7x:2x2x1
jax: 0.10.0
libtpu: 0.0.40
codegen_flags: <defaults>
</compile_context>

<pallas_src>
import jax
import jax.numpy as jnp
from jax.experimental import pallas as pl
from jax.experimental.pallas import tpu as pltpu


def _round_up(x: int, m: int) -> int:
    return ((x + m - 1) // m) * m


def _cdiv(a: int, b: int) -> int:
    return (a + b - 1) // b


# ---------------------------------------------------------------------------
# Kernel
# ---------------------------------------------------------------------------
def _policy_kernel(state_ref,          # (tm, S)   f32  (cast to bf16 in-kernel)
                   w1_ref, b1_ref,     # (S,  H1)  bf16, (1, H1) f32
                   w2_ref, b2_ref,     # (H1, H2)  bf16, (1, H2) f32
                   wh_ref, bh_ref,     # (H2, 2A)  bf16, (1, 2A) f32 (fused heads)
                   lo_ref, hi_ref,     # (1, 2A)   f32 clamp vectors
                   out_ref):           # (tm, 2A)  f32  [mean | log_std]
    """Fused MLP: two ReLU-Linear layers + one fused (mean||log_std) head.

    Matmuls run on the MXU in bf16 with f32 accumulation; bias add, ReLU and
    the per-column clamp run on the VPU. Everything stays in VMEM.
    """
    x = state_ref[...].astype(jnp.bfloat16)

    # layer1: (tm, S) @ (S, H1) + b1, ReLU  (zero-padded H1 columns stay 0)
    h1 = jnp.dot(x, w1_ref[...], preferred_element_type=jnp.float32)
    h1 = jnp.maximum(h1 + b1_ref[...], 0.0)

    # layer2: (tm, H1) @ (H1, H2) + b2, ReLU
    h2 = jnp.dot(h1.astype(jnp.bfloat16), w2_ref[...],
                 preferred_element_type=jnp.float32)
    h2 = jnp.maximum(h2 + b2_ref[...], 0.0)

    # fused heads: (tm, H2) @ (H2, 2A) + bh
    y = jnp.dot(h2.astype(jnp.bfloat16), wh_ref[...],
                preferred_element_type=jnp.float32)
    y = y + bh_ref[...]

    # per-column clamp: mean columns see (-inf, +inf); log_std columns see
    # (log_std_min, log_std_max).
    out_ref[...] = jnp.minimum(jnp.maximum(y, lo_ref[...]),
                               hi_ref[...]).astype(out_ref.dtype)


# ---------------------------------------------------------------------------
# Parameter packing: lane-align hidden dims, fuse heads, cast weights to bf16.
# Done ONCE (packed params stay device-resident across forward calls).
# ---------------------------------------------------------------------------
def pack_params(params, log_std_min, log_std_max):
    S, H1r = params["w1"].shape
    H2r = params["w2"].shape[1]
    A = params["wm"].shape[1]

    H1 = _round_up(H1r, 128)          # 400 -> 512 (lane-aligned hidden dims)
    H2 = _round_up(H2r, 128)          # 300 -> 384
    A2 = 2 * A                        # fused mean||log_std head, NO lane pad

    def pad2(x, r, c):
        return jnp.pad(x, ((0, r - x.shape[0]), (0, c - x.shape[1])))

    wh = jnp.concatenate([params["wm"], params["ws"]], axis=1)   # (H2r, 2A)
    bh = jnp.concatenate([params["bm"], params["bs"]], axis=1)   # (1, 2A)

    lo = jnp.concatenate(
        [jnp.full((1, A), -jnp.inf, jnp.float32),
         jnp.full((1, A), float(log_std_min), jnp.float32)], axis=1)
    hi = jnp.concatenate(
        [jnp.full((1, A), jnp.inf, jnp.float32),
         jnp.full((1, A), float(log_std_max), jnp.float32)], axis=1)

    return {
        "w1": pad2(params["w1"], S, H1).astype(jnp.bfloat16),    # (S,  H1)
        "b1": pad2(params["b1"], 1, H1).astype(jnp.float32),
        "w2": pad2(params["w2"], H1, H2).astype(jnp.bfloat16),   # (H1, H2)
        "b2": pad2(params["b2"], 1, H2).astype(jnp.float32),
        "wh": pad2(wh, H2, A2).astype(jnp.bfloat16),             # (H2, 2A)
        "bh": bh.astype(jnp.float32),
        "lo": lo, "hi": hi,
        "dims": (S, A, H1, H2, A2),
    }


# ---------------------------------------------------------------------------
# Batch tiling: tile up to `max_tile` rows, waste at most one sublane group.
# ---------------------------------------------------------------------------
def _choose_tiling(B: int, max_tile: int = 512):
    B8 = _round_up(max(B, 8), 8)      # at least one f32 sublane group
    if B8 <= max_tile:
        return B8, B8, 1              # (tm, B_pad, grid_len)
    g = _cdiv(B8, max_tile)
    tm = _round_up(_cdiv(B8, g), 8)
    return tm, g * tm, g


# ---------------------------------------------------------------------------
# Forward wrapper
# ---------------------------------------------------------------------------
def policy_network_forward(state, packed, max_tile: int = 512):
    """state: (B, state_dim) f32. Returns (mean, log_std), each (B, action_dim)."""
    S, A, H1, H2, A2 = packed["dims"]
    B = state.shape[0]

    tm, B_pad, grid_len = _choose_tiling(B, max_tile)

    x = state.astype(jnp.float32)
    if B_pad != B:
        # zero rows flow through bias/ReLU/clamp harmlessly and are sliced off.
        x = jnp.pad(x, ((0, B_pad - B), (0, 0)))

    weight_bytes = 2 * (S * H1 + H1 * H2 + H2 * A2)              # bf16 weights
    bias_bytes = 4 * (H1 + H2 + 3 * A2)                          # f32 b1/b2/bh/lo/hi
    act_bytes = 4 * B_pad * S + 4 * B_pad * A2                   # f32 in / f32 out
    cost = pl.CostEstimate(
        flops=2 * B_pad * (S * H1 + H1 * H2 + H2 * A2),
        transcendentals=0,
        bytes_accessed=weight_bytes + bias_bytes + act_bytes,
    )

    out = pl.pallas_call(
        _policy_kernel,
        out_shape=jax.ShapeDtypeStruct((B_pad, A2), jnp.float32),
        grid_spec=pltpu.PrefetchScalarGridSpec(
            num_scalar_prefetch=0,
            grid=(grid_len,),
            in_specs=[
                pl.BlockSpec((tm, S), lambda i: (i, 0)),     # state tiles stream
                pl.BlockSpec((S, H1), lambda i: (0, 0)),     # weights resident
                pl.BlockSpec((1, H1), lambda i: (0, 0)),
                pl.BlockSpec((H1, H2), lambda i: (0, 0)),
                pl.BlockSpec((1, H2), lambda i: (0, 0)),
                pl.BlockSpec((H2, A2), lambda i: (0, 0)),
                pl.BlockSpec((1, A2), lambda i: (0, 0)),
                pl.BlockSpec((1, A2), lambda i: (0, 0)),     # lo
                pl.BlockSpec((1, A2), lambda i: (0, 0)),     # hi
            ],
            out_specs=pl.BlockSpec((tm, A2), lambda i: (i, 0)),
        ),
        compiler_params=pltpu.CompilerParams(
            dimension_semantics=("parallel",)),              # shards on v7x's 2 TCs
        cost_estimate=cost,
    )(x, packed["w1"], packed["b1"], packed["w2"], packed["b2"],
      packed["wh"], packed["bh"], packed["lo"], packed["hi"])

    mean = out[:B, :A]
    log_std = out[:B, A:2 * A]
    return mean, log_std


# ---------------------------------------------------------------------------
# Init + references
# ---------------------------------------------------------------------------
def init_params(key, state_dim, action_dim):
    """nn.Linear-style init; weights stored (in_features, out_features)."""
    ks = jax.random.split(key, 8)

    def uniform(k, shape, fan_in):
        bound = 1.0 / jnp.sqrt(jnp.float32(fan_in))
        return jax.random.uniform(k, shape, jnp.float32, -bound, bound)

    return {
        "w1": uniform(ks[0], (state_dim, 400), state_dim),
        "b1": uniform(ks[1], (1, 400), state_dim),
        "w2": uniform(ks[2], (400, 300), 400),
        "b2": uniform(ks[3], (1, 300), 400),
        "wm": uniform(ks[4], (300, action_dim), 300),
        "bm": uniform(ks[5], (1, action_dim), 300),
        "ws": uniform(ks[6], (300, action_dim), 300),
        "bs": uniform(ks[7], (1, action_dim), 300),
    }


def reference_forward_f32(state, params, log_std_min, log_std_max):
    """Exact PyTorch-module math in f32."""
    h1 = jax.nn.relu(state @ params["w1"] + params["b1"])
    h2 = jax.nn.relu(h1 @ params["w2"] + params["b2"])
    mean = h2 @ params["wm"] + params["bm"]
    log_std = jnp.clip(h2 @ params["ws"] + params["bs"], log_std_min, log_std_max)
    return mean, log_std


def reference_forward_bf16(state, params, log_std_min, log_std_max):
    """Same math with the kernel's precision policy (bf16 matmul inputs,
    f32 accumulation / bias / ReLU / clamp) — used for the tight check."""
    def bdot(x, w):
        return jnp.dot(x.astype(jnp.bfloat16), w.astype(jnp.bfloat16),
                       preferred_element_type=jnp.float32)
    h1 = jax.nn.relu(bdot(state, params["w1"]) + params["b1"])
    h2 = jax.nn.relu(bdot(h1, params["w2"]) + params["b2"])
    mean = bdot(h2, params["wm"]) + params["bm"]
    log_std = jnp.clip(bdot(h2, params["ws"]) + params["bs"],
                       log_std_min, log_std_max)
    return mean, log_std


if __name__ == "__main__":
    # Small, module-consistent shapes: batch=2, state_dim=16, action_dim=4.
    B, STATE_DIM, ACTION_DIM = 2, 16, 4
    LOG_STD_MIN, LOG_STD_MAX = -20.0, 2.0

    key = jax.random.PRNGKey(0)
    pkey, skey = jax.random.split(key)

    params = init_params(pkey, STATE_DIM, ACTION_DIM)
    packed = pack_params(params, LOG_STD_MIN, LOG_STD_MAX)
    state = jax.random.normal(skey, (B, STATE_DIM), jnp.float32)

    mean, log_std = policy_network_forward(state, packed)
    jax.block_until_ready((mean, log_std))

    assert mean.shape == (B, ACTION_DIM) and log_std.shape == (B, ACTION_DIM)

    # Tight check vs a reference using the kernel's precision policy.
    ref_m, ref_ls = reference_forward_bf16(state, params, LOG_STD_MIN, LOG_STD_MAX)
    assert jnp.allclose(mean, ref_m, atol=1e-3, rtol=1e-3)
    assert jnp.allclose(log_std, ref_ls, atol=1e-3, rtol=1e-3)

    # Loose sanity check vs the exact f32 PyTorch-module math.
    f32_m, f32_ls = reference_forward_f32(state, params, LOG_STD_MIN, LOG_STD_MAX)
    assert jnp.allclose(mean, f32_m, atol=5e-2, rtol=5e-2)
    assert jnp.allclose(log_std, f32_ls, atol=5e-2, rtol=5e-2)
    assert jnp.all(log_std >= LOG_STD_MIN) and jnp.all(log_std <= LOG_STD_MAX)

    # TODO(synk): `predict()` (tanh-squashed sampling + log_prob) is a stochastic
    # host-side convenience method and is not part of the forward kernel.

    print("KERNEL_OK")
</pallas_src>

<mosaic_0001>
module attributes {stable_mosaic.version = 11 : i64} {
  func.func @_policy_kernel(%arg0: i32, %arg1: memref<8x16xf32, #tpu.memory_space<vmem>>, %arg2: memref<16x512xbf16, #tpu.memory_space<vmem>>, %arg3: memref<1x512xf32, #tpu.memory_space<vmem>>, %arg4: memref<512x384xbf16, #tpu.memory_space<vmem>>, %arg5: memref<1x384xf32, #tpu.memory_space<vmem>>, %arg6: memref<384x8xbf16, #tpu.memory_space<vmem>>, %arg7: memref<1x8xf32, #tpu.memory_space<vmem>>, %arg8: memref<1x8xf32, #tpu.memory_space<vmem>>, %arg9: memref<1x8xf32, #tpu.memory_space<vmem>>, %arg10: memref<8x8xf32, #tpu.memory_space<vmem>>) attributes {dimension_semantics = [#tpu.dimension_semantics<parallel>], iteration_bounds = array<i64: 1>, scalar_prefetch = 0 : i64, scratch_operands = 0 : i64, tpu.core_type = #tpu.core_type<tc>, window_params = [{transform_indices = @transform_0, window_bounds = array<i64: 8, 16>}, {pipeline_mode = #tpu.pipeline_mode<synchronous>, transform_indices = @transform_1, window_bounds = array<i64: 16, 512>}, {pipeline_mode = #tpu.pipeline_mode<synchronous>, transform_indices = @transform_2, window_bounds = array<i64: 1, 512>}, {pipeline_mode = #tpu.pipeline_mode<synchronous>, transform_indices = @transform_3, window_bounds = array<i64: 512, 384>}, {pipeline_mode = #tpu.pipeline_mode<synchronous>, transform_indices = @transform_4, window_bounds = array<i64: 1, 384>}, {pipeline_mode = #tpu.pipeline_mode<synchronous>, transform_indices = @transform_5, window_bounds = array<i64: 384, 8>}, {pipeline_mode = #tpu.pipeline_mode<synchronous>, transform_indices = @transform_6, window_bounds = array<i64: 1, 8>}, {pipeline_mode = #tpu.pipeline_mode<synchronous>, transform_indices = @transform_7, window_bounds = array<i64: 1, 8>}, {pipeline_mode = #tpu.pipeline_mode<synchronous>, transform_indices = @transform_8, window_bounds = array<i64: 1, 8>}, {transform_indices = @transform_9, window_bounds = array<i64: 8, 8>}]} {
    %c0 = arith.constant 0 : index
    %c0_0 = arith.constant 0 : index
    %0 = vector.load %arg1[%c0, %c0_0] : memref<8x16xf32, #tpu.memory_space<vmem>>, vector<8x16xf32>
    %1 = arith.truncf %0 : vector<8x16xf32> to vector<8x16xbf16>
    %c0_1 = arith.constant 0 : index
    %c0_2 = arith.constant 0 : index
    %2 = vector.load %arg2[%c0_1, %c0_2] : memref<16x512xbf16, #tpu.memory_space<vmem>>, vector<16x512xbf16>
    %cst = arith.constant dense<0.000000e+00> : vector<8x512xf32>
    %3 = tpu.matmul %1, %2, %cst {dimension_numbers = #tpu.dot_dimension_numbers<[1], [0], [0], [1], [0, 0, 1, 1], [], []>} : vector<8x16xbf16>, vector<16x512xbf16>, vector<8x512xf32> -> vector<8x512xf32>
    %c0_3 = arith.constant 0 : index
    %c0_4 = arith.constant 0 : index
    %4 = vector.load %arg3[%c0_3, %c0_4] : memref<1x512xf32, #tpu.memory_space<vmem>>, vector<1x512xf32>
    %5 = vector.broadcast %4 : vector<1x512xf32> to vector<8x512xf32>
    %6 = arith.addf %3, %5 : vector<8x512xf32>
    %cst_5 = arith.constant 0.000000e+00 : f32
    %7 = vector.broadcast %cst_5 : f32 to vector<8x512xf32>
    %8 = arith.maximumf %6, %7 : vector<8x512xf32>
    %9 = arith.truncf %8 : vector<8x512xf32> to vector<8x512xbf16>
    %c0_6 = arith.constant 0 : index
    %c0_7 = arith.constant 0 : index
    %10 = vector.load %arg4[%c0_6, %c0_7] : memref<512x384xbf16, #tpu.memory_space<vmem>>, vector<512x384xbf16>
    %cst_8 = arith.constant dense<0.000000e+00> : vector<8x384xf32>
    %11 = tpu.matmul %9, %10, %cst_8 {dimension_numbers = #tpu.dot_dimension_numbers<[1], [0], [0], [1], [0, 0, 1, 1], [], []>} : vector<8x512xbf16>, vector<512x384xbf16>, vector<8x384xf32> -> vector<8x384xf32>
    %c0_9 = arith.constant 0 : index
    %c0_10 = arith.constant 0 : index
    %12 = vector.load %arg5[%c0_9, %c0_10] : memref<1x384xf32, #tpu.memory_space<vmem>>, vector<1x384xf32>
    %13 = vector.broadcast %12 : vector<1x384xf32> to vector<8x384xf32>
    %14 = arith.addf %11, %13 : vector<8x384xf32>
    %cst_11 = arith.constant 0.000000e+00 : f32
    %15 = vector.broadcast %cst_11 : f32 to vector<8x384xf32>
    %16 = arith.maximumf %14, %15 : vector<8x384xf32>
    %17 = arith.truncf %16 : vector<8x384xf32> to vector<8x384xbf16>
    %c0_12 = arith.constant 0 : index
    %c0_13 = arith.constant 0 : index
    %18 = vector.load %arg6[%c0_12, %c0_13] : memref<384x8xbf16, #tpu.memory_space<vmem>>, vector<384x8xbf16>
    %cst_14 = arith.constant dense<0.000000e+00> : vector<8x8xf32>
    %19 = tpu.matmul %17, %18, %cst_14 {dimension_numbers = #tpu.dot_dimension_numbers<[1], [0], [0], [1], [0, 0, 1, 1], [], []>} : vector<8x384xbf16>, vector<384x8xbf16>, vector<8x8xf32> -> vector<8x8xf32>
    %c0_15 = arith.constant 0 : index
    %c0_16 = arith.constant 0 : index
    %20 = vector.load %arg7[%c0_15, %c0_16] : memref<1x8xf32, #tpu.memory_space<vmem>>, vector<1x8xf32>
    %21 = vector.broadcast %20 : vector<1x8xf32> to vector<8x8xf32>
    %22 = arith.addf %19, %21 : vector<8x8xf32>
    %c0_17 = arith.constant 0 : index
    %c0_18 = arith.constant 0 : index
    %23 = vector.load %arg8[%c0_17, %c0_18] : memref<1x8xf32, #tpu.memory_space<vmem>>, vector<1x8xf32>
    %24 = vector.broadcast %23 : vector<1x8xf32> to vector<8x8xf32>
    %25 = arith.maximumf %22, %24 : vector<8x8xf32>
    %c0_19 = arith.constant 0 : index
    %c0_20 = arith.constant 0 : index
    %26 = vector.load %arg9[%c0_19, %c0_20] : memref<1x8xf32, #tpu.memory_space<vmem>>, vector<1x8xf32>
    %27 = vector.broadcast %26 : vector<1x8xf32> to vector<8x8xf32>
    %28 = arith.minimumf %25, %27 : vector<8x8xf32>
    %c0_21 = arith.constant 0 : index
    %c0_22 = arith.constant 0 : index
    %29 = vector.load %arg10[%c0_21, %c0_22] : memref<8x8xf32, #tpu.memory_space<vmem>>, vector<8x8xf32>
    tpu.vector_store %arg10[%c0_21, %c0_22], %28 {strides = array<i32>} : memref<8x8xf32, #tpu.memory_space<vmem>>, vector<8x8xf32>,
    return
  }
  func.func @transform_0(%arg0: i32) -> (i32, i32) {
    %c0_i32 = arith.constant 0 : i32
    %c0_i32_0 = arith.constant 0 : i32
    return %arg0, %c0_i32 : i32, i32
  }
  func.func @transform_1(%arg0: i32) -> (i32, i32) {
    %c0_i32 = arith.constant 0 : i32
    %c0_i32_0 = arith.constant 0 : i32
    %c0_i32_1 = arith.constant 0 : i32
    return %c0_i32, %c0_i32_0 : i32, i32
  }
  func.func @transform_2(%arg0: i32) -> (i32, i32) {
    %c0_i32 = arith.constant 0 : i32
    %c0_i32_0 = arith.constant 0 : i32
    %c0_i32_1 = arith.constant 0 : i32
    return %c0_i32, %c0_i32_0 : i32, i32
  }
  func.func @transform_3(%arg0: i32) -> (i32, i32) {
    %c0_i32 = arith.constant 0 : i32
    %c0_i32_0 = arith.constant 0 : i32
    %c0_i32_1 = arith.constant 0 : i32
    return %c0_i32, %c0_i32_0 : i32, i32
  }
  func.func @transform_4(%arg0: i32) -> (i32, i32) {
    %c0_i32 = arith.constant 0 : i32
    %c0_i32_0 = arith.constant 0 : i32
    %c0_i32_1 = arith.constant 0 : i32
    return %c0_i32, %c0_i32_0 : i32, i32
  }
  func.func @transform_5(%arg0: i32) -> (i32, i32) {
    %c0_i32 = arith.constant 0 : i32
    %c0_i32_0 = arith.constant 0 : i32
    %c0_i32_1 = arith.constant 0 : i32
    return %c0_i32, %c0_i32_0 : i32, i32
  }
  func.func @transform_6(%arg0: i32) -> (i32, i32) {
    %c0_i32 = arith.constant 0 : i32
    %c0_i32_0 = arith.constant 0 : i32
    %c0_i32_1 = arith.constant 0 : i32
    return %c0_i32, %c0_i32_0 : i32, i32
  }
  func.func @transform_7(%arg0: i32) -> (i32, i32) {
    %c0_i32 = arith.constant 0 : i32
    %c0_i32_0 = arith.constant 0 : i32
    %c0_i32_1 = arith.constant 0 : i32
    return %c0_i32, %c0_i32_0 : i32, i32
  }
  func.func @transform_8(%arg0: i32) -> (i32, i32) {
    %c0_i32 = arith.constant 0 : i32
    %c0_i32_0 = arith.constant 0 : i32
    %c0_i32_1 = arith.constant 0 : i32
    return %c0_i32, %c0_i32_0 : i32, i32
  }
  func.func @transform_9(%arg0: i32) -> (i32, i32) {
    %c0_i32 = arith.constant 0 : i32
    %c0_i32_0 = arith.constant 0 : i32
    return %arg0, %c0_i32 : i32, i32
  }
}

</mosaic_0001>

<llo_original>
// kernel: tpu_custom_call.1
$region0: #{tpu_custom_call.1}
  #allocation0 [shape = 'u32[]', space=smem, size = 0x4, offset = 0x4, fixed_abs, tag = 'smem constant byte address 0x4 - core index']
  #allocation1 [shape = 'u32[144,128]{1,0:T(1,128)}', space=vmem, size = 0x12000, scoped, tag = 'internal scratch']
  %s0 = inlined_call_operand.vmem [shape: f32[8,16], index: 0, kind: input, shape index: {}]
  %s1 = inlined_call_operand.vmem [shape: bf16[16,512], index: 1, kind: input, shape index: {}]
  %s2 = inlined_call_operand.vmem [shape: f32[1,512], index: 2, kind: input, shape index: {}]
  %s3 = inlined_call_operand.hbm [shape: bf16[512,384], index: 3, kind: input, shape index: {}]
  %s4 = inlined_call_operand.vmem [shape: f32[1,384], index: 4, kind: input, shape index: {}]
  %s5 = inlined_call_operand.vmem [shape: bf16[384,8], index: 5, kind: input, shape index: {}]
  %s6 = inlined_call_operand.vmem [shape: f32[1,8], index: 6, kind: input, shape index: {}]
  %s7 = inlined_call_operand.vmem [shape: f32[1,8], index: 7, kind: input, shape index: {}]
  %s8 = inlined_call_operand.vmem [shape: f32[1,8], index: 8, kind: input, shape index: {}]
  %s9 = inlined_call_operand.hbm [shape: f32[8,8], index: 9, kind: output, shape index: {}]
  %s10 = sld [smem:[#allocation0]]
  $region50: #{tpu_custom_call.1} parent=0
    _
  %s12 = ssub.s32 1, %s10
  %s13 = scalar_select 0, %s12, %s10
  $region1: #{tpu_custom_call.1} parent=0
    #allocation2 [shape = 'u8[393216]{0}', space=vmem, size = 0x60000, scoped, tag = 'input window, operand 3, single buffered']
    #allocation3 [shape = 's32[1]{0}', space=sflag, size = 0x4, scoped, tag = 'scoped memory for tpu_custom_call.1']
    #allocation4 [shape = 's32[1]{0}', space=sflag, size = 0x4, scoped, tag = 'scoped memory for tpu_custom_call.1']
    #allocation5 [shape = 'u8[4096]{0}', space=vmem, size = 0x1000, scoped, tag = 'output window, operand 0, single buffered']
    %14 = vsyncpa [#allocation3], 0
    %15 = vsyncpa [#allocation4], 0
    // Predicated region
    $region2: #{tpu_custom_call.1} parent=1 // pred_check
      _
    $region3: #{tpu_custom_call.1} parent=1 // pred_check_branch
      %17 = sbr.rel (0) target = $region5
    $region4: #{tpu_custom_call.1} parent=1 // pred_region
      _
    $region5: #{tpu_custom_call.1} parent=1 // pred_fallthru
      _
    // Predicated region
    $region6: #{tpu_custom_call.1} parent=1 // pred_check
      _
    $region7: #{tpu_custom_call.1} parent=1 // pred_check_branch
      %19 = sbr.rel (0) target = $region9
    $region8: #{tpu_custom_call.1} parent=1 // pred_region
      _
    $region9: #{tpu_custom_call.1} parent=1 // pred_fallthru
      _
    // Predicated region
    $region10: #{tpu_custom_call.1} parent=1 // pred_check
      _
    $region11: #{tpu_custom_call.1} parent=1 // pred_check_branch
      %21 = sbr.rel (0) target = $region13
    $region12: #{tpu_custom_call.1} parent=1 // pred_region
      _
    $region13: #{tpu_custom_call.1} parent=1 // pred_fallthru
      _
    // Predicated region
    $region14: #{tpu_custom_call.1} parent=1 // pred_check
      _
    $region15: #{tpu_custom_call.1} parent=1 // pred_check_branch
      %23 = sbr.rel (0) target = $region17
    $region16: #{tpu_custom_call.1} parent=1 // pred_region
      %s25 = ssub.s32 12288, 12288
      %26 = vsyncadd [#allocation3], %s25
      %s27 = sshll.u32 [#allocation2], 4
      %s28 = int_to_ptr.vmem [resolvable:$true] %s27
      %33 = dma.hbm_to_vmem [thread:$0]  %s3, 12288, %s28, [#allocation3], 192, 192, 12
    $region17: #{tpu_custom_call.1} parent=1 // pred_fallthru
      _
    // Predicated region
    $region18: #{tpu_custom_call.1} parent=1 // pred_check
      _
    $region19: #{tpu_custom_call.1} parent=1 // pred_check_branch
      %35 = sbr.rel (0) target = $region21
    $region20: #{tpu_custom_call.1} parent=1 // pred_region
      _
    $region21: #{tpu_custom_call.1} parent=1 // pred_fallthru
      _
    // Predicated region
    $region22: #{tpu_custom_call.1} parent=1 // pred_check
      _
    $region23: #{tpu_custom_call.1} parent=1 // pred_check_branch
      %37 = sbr.rel (0) target = $region25
    $region24: #{tpu_custom_call.1} parent=1 // pred_region
      _
    $region25: #{tpu_custom_call.1} parent=1 // pred_fallthru
      _
    // Predicated region
    $region26: #{tpu_custom_call.1} parent=1 // pred_check
      _
    $region27: #{tpu_custom_call.1} parent=1 // pred_check_branch
      %39 = sbr.rel (0) target = $region29
    $region28: #{tpu_custom_call.1} parent=1 // pred_region
      _
    $region29: #{tpu_custom_call.1} parent=1 // pred_fallthru
      _
    // Predicated region
    $region30: #{tpu_custom_call.1} parent=1 // pred_check
      _
    $region31: #{tpu_custom_call.1} parent=1 // pred_check_branch
      %41 = sbr.rel (0) target = $region33
    $region32: #{tpu_custom_call.1} parent=1 // pred_region
      _
    $region33: #{tpu_custom_call.1} parent=1 // pred_fallthru
      _
    // Predicated region
    $region34: #{tpu_custom_call.1} parent=1 // pred_check
      _
    $region35: #{tpu_custom_call.1} parent=1 // pred_check_branch
      %43 = sbr.rel (0) target = $region37
    $region36: #{tpu_custom_call.1} parent=1 // pred_region
      _
    $region37: #{tpu_custom_call.1} parent=1 // pred_fallthru
      _
    // Predicated region
    $region38: #{tpu_custom_call.1} parent=1 // pred_check
      _
    $region39: #{tpu_custom_call.1} parent=1 // pred_check_branch
      %45 = sbr.rel (0) target = $region41
    $region40: #{tpu_custom_call.1} parent=1 // pred_region
      %46 = dma.done [#allocation3], 12288
    $region41: #{tpu_custom_call.1} parent=1 // pred_fallthru
      _
    %v48 = vld [vmem:[%s0] sm:$0xff]
    %v49 = vpack.c.bf16 %v48, %v48
    %v50 = vld [vmem:[%s1] sm:$0xff]
    %v51 = vld [vmem:[%s1 + $0x8] sm:$0xff]
    %v52 = vld [vmem:[%s1 + $0x10] sm:$0xff]
    %v53 = vld [vmem:[%s1 + $0x18] sm:$0xff]
    %v54 = vld [vmem:[%s2] sm:$0xf]
    %v56 = vlaneseq
    %v57 = vshrl.u32 %v56, 7
    %v58 = vsub.s32 0, %v57
    %v59 = vrot.slane %v54, %v58
    %v60 = vlaneseq
    %v61 = vshrl.u32 %v60, 7
    %v62 = vsub.s32 1, %v61
    %v63 = vrot.slane %v54, %v62
    %v64 = vlaneseq
    %v65 = vshrl.u32 %v64, 7
    %v66 = vsub.s32 2, %v65
    %v67 = vrot.slane %v54, %v66
    %v68 = vlaneseq
    %v69 = vshrl.u32 %v68, 7
    %v70 = vsub.s32 3, %v69
    %v71 = vrot.slane %v54, %v70
    %v80 = vunpack.c.l.b16 %v50
    %v81 = vunpack.c.h.b16 %v50
    %v82 = vunpack.c.l.b16 %v51
    %v83 = vunpack.c.h.b16 %v51
    %v84 = vunpack.c.l.b16 %v52
    %v85 = vunpack.c.h.b16 %v52
    %v86 = vunpack.c.l.b16 %v53
    %v87 = vunpack.c.h.b16 %v53
    %v88 = vpack.c.b16 %v84, %v80
    %v89 = vpack.c.b16 %v85, %v81
    %v90 = vpack.c.b16 %v86, %v82
    %v91 = vpack.c.b16 %v87, %v83
    %vm96 = vcmask 130048
    %v98 = vsel %vm96, %v49, 0
    %100 = vmatprep.subr.bf16.mxu0 %v89
    %101 = vmatpush1.bf16.msra.mxu0 %v88
    %102 = vmatprep.subr.bf16.mxu0 0
    %103 = vmatpush1.bf16.msra.mxu0 0
    %104 = vmatprep.subr.bf16.mxu0 0
    %105 = vmatpush1.bf16.msra.mxu0 0
    %106 = vmatprep.subr.bf16.mxu0 0
    %107 = vmatpush1.bf16.msra.mxu0 0
    %108 = vmatprep.subr.bf16.mxu0 0
    %109 = vmatpush1.bf16.msra.mxu0 0
    %110 = vmatprep.subr.bf16.mxu0 0
    %111 = vmatpush1.bf16.msra.mxu0 0
    %112 = vmatprep.subr.bf16.mxu0 0
    %113 = vmatpush1.bf16.msra.mxu0 0
    %114 = vmatprep.subr.bf16.mxu0 0
    %115 = vmatpush1.bf16.msra.mxu0 0
    %116 = vmatprep.subr.bf16.mxu0 0
    %117 = vmatpush1.bf16.msra.mxu0 0
    %118 = vmatprep.subr.bf16.mxu0 0
    %119 = vmatpush1.bf16.msra.mxu0 0
    %120 = vmatprep.subr.bf16.mxu0 0
    %121 = vmatpush1.bf16.msra.mxu0 0
    %122 = vmatprep.subr.bf16.mxu0 0
    %123 = vmatpush1.bf16.msra.mxu0 0
    %124 = vmatprep.subr.bf16.mxu0 0
    %125 = vmatpush1.bf16.msra.mxu0 0
    %126 = vmatprep.subr.bf16.mxu0 0
    %127 = vmatpush1.bf16.msra.mxu0 0
    %128 = vmatprep.subr.bf16.mxu0 0
    %129 = vmatpush1.bf16.msra.mxu0 0
    %130 = vmatprep.subr.bf16.mxu0 0
    %131 = vmatpush1.bf16.msra.mxu0 0
    %132 = vmatprep.mubr.bf16.mxu0 0
    %133 = vmatmul.mubr.bf16.gmra.mrb[0].mxu0 %v98
    %v134 = vpop.f32.mrb[0].mxu0
    %v135 = vadd.f32 %v59, %v134
    %v136 = vpop.f32.mrb[0].mxu0
    %v137 = vadd.f32 %v63, %v136
    %v138 = vpop.f32.mrb[0].mxu0
    %v139 = vpop.f32.mrb[0].mxu0
    %140 = vdwg.mxu0
    %141 = vmatprep.subr.bf16.mxu0 %v91
    %142 = vmatpush1.bf16.msra.mxu0 %v90
    %143 = vmatprep.subr.bf16.mxu0 0
    %144 = vmatpush1.bf16.msra.mxu0 0
    %145 = vmatprep.subr.bf16.mxu0 0
    %146 = vmatpush1.bf16.msra.mxu0 0
    %147 = vmatprep.subr.bf16.mxu0 0
    %148 = vmatpush1.bf16.msra.mxu0 0
    %149 = vmatprep.subr.bf16.mxu0 0
    %150 = vmatpush1.bf16.msra.mxu0 0
    %151 = vmatprep.subr.bf16.mxu0 0
    %152 = vmatpush1.bf16.msra.mxu0 0
    %153 = vmatprep.subr.bf16.mxu0 0
    %154 = vmatpush1.bf16.msra.mxu0 0
    %155 = vmatprep.subr.bf16.mxu0 0
    %156 = vmatpush1.bf16.msra.mxu0 0
    %157 = vmatprep.subr.bf16.mxu0 0
    %158 = vmatpush1.bf16.msra.mxu0 0
    %159 = vmatprep.subr.bf16.mxu0 0
    %160 = vmatpush1.bf16.msra.mxu0 0
    %161 = vmatprep.subr.bf16.mxu0 0
    %162 = vmatpush1.bf16.msra.mxu0 0
    %163 = vmatprep.subr.bf16.mxu0 0
    %164 = vmatpush1.bf16.msra.mxu0 0
    %165 = vmatprep.subr.bf16.mxu0 0
    %166 = vmatpush1.bf16.msra.mxu0 0
    %167 = vmatprep.subr.bf16.mxu0 0
    %168 = vmatpush1.bf16.msra.mxu0 0
    %169 = vmatprep.subr.bf16.mxu0 0
    %170 = vmatpush1.bf16.msra.mxu0 0
    %171 = vmatprep.subr.bf16.mxu0 0
    %172 = vmatpush1.bf16.msra.mxu0 0
    %173 = vmatprep.mubr.bf16.mxu0 0
    %174 = vmatmul.mubr.bf16.gmra.mrb[0].mxu0 %v98
    %v175 = vpop.f32.mrb[0].mxu0
    %v176 = vadd.f32 %v67, %v175
    %v177 = vpop.f32.mrb[0].mxu0
    %v178 = vadd.f32 %v71, %v177
    %v179 = vpop.f32.mrb[0].mxu0
    %v180 = vpop.f32.mrb[0].mxu0
    %181 = vdwg.mxu0
    %v182 = vmax.f32 %v135, 0.0
    %v183 = vmax.f32 %v137, 0.0
    %v184 = vmax.f32 %v176, 0.0
    %v185 = vmax.f32 %v178, 0.0
    %v186 = vpack.c.bf16 %v182, %v182
    %v187 = vpack.c.bf16 %v183, %v183
    %v188 = vpack.c.bf16 %v184, %v184
    %v189 = vpack.c.bf16 %v185, %v185
    %v190 = vld [vmem:[#allocation2] sm:$0xff]
    %v191 = vld [vmem:[#allocation2 + $0x8] sm:$0xf]
    %v192 = vld [vmem:[#allocation2 + $0xc] sm:$0xff]
    %v193 = vld [vmem:[#allocation2 + $0x14] sm:$0xf]
    %v194 = vld [vmem:[#allocation2 + $0x18] sm:$0xff]
    %v195 = vld [vmem:[#allocation2 + $0x20] sm:$0xf]
    %v196 = vld [vmem:[#allocation2 + $0x24] sm:$0xff]
    %v197 = vld [vmem:[#allocation2 + $0x2c] sm:$0xf]
    %v198 = vld [vmem:[#allocation2 + $0x30] sm:$0xff]
    %v199 = vld [vmem:[#allocation2 + $0x38] sm:$0xf]
    %v200 = vld [vmem:[#allocation2 + $0x3c] sm:$0xff]
    %v201 = vld [vmem:[#allocation2 + $0x44] sm:$0xf]
    %v202 = vld [vmem:[#allocation2 + $0x48] sm:$0xff]
    %v203 = vld [vmem:[#allocation2 + $0x50] sm:$0xf]
    %v204 = vld [vmem:[#allocation2 + $0x54] sm:$0xff]
    %v205 = vld [vmem:[#allocation2 + $0x5c] sm:$0xf]
    %v206 = vld [vmem:[#allocation2 + $0x60] sm:$0xff]
    %v207 = vld [vmem:[#allocation2 + $0x68] sm:$0xf]
    %v208 = vld [vmem:[#allocation2 + $0x6c] sm:$0xff]
    %v209 = vld [vmem:[#allocation2 + $0x74] sm:$0xf]
    %v210 = vld [vmem:[#allocation2 + $0x78] sm:$0xff]
    %v211 = vld [vmem:[#allocation2 + $0x80] sm:$0xf]
    %v212 = vld [vmem:[#allocation2 + $0x84] sm:$0xff]
    %v213 = vld [vmem:[#allocation2 + $0x8c] sm:$0xf]
    %v214 = vld [vmem:[#allocation2 + $0x90] sm:$0xff]
    %v215 = vld [vmem:[#allocation2 + $0x98] sm:$0xf]
    %v216 = vld [vmem:[#allocation2 + $0x9c] sm:$0xff]
    %v217 = vld [vmem:[#allocation2 + $0xa4] sm:$0xf]
    %v218 = vld [vmem:[#allocation2 + $0xa8] sm:$0xff]
    %v219 = vld [vmem:[#allocation2 + $0xb0] sm:$0xf]
    %v220 = vld [vmem:[#allocation2 + $0xb4] sm:$0xff]
    %v221 = vld [vmem:[#allocation2 + $0xbc] sm:$0xf]
    %v222 = vld [vmem:[#allocation2 + $0xc0] sm:$0xff]
    %v223 = vld [vmem:[#allocation2 + $0xc8] sm:$0xf]
    %v224 = vld [vmem:[#allocation2 + $0xcc] sm:$0xff]
    %v225 = vld [vmem:[#allocation2 + $0xd4] sm:$0xf]
    %v226 = vld [vmem:[#allocation2 + $0xd8] sm:$0xff]
    %v227 = vld [vmem:[#allocation2 + $0xe0] sm:$0xf]
    %v228 = vld [vmem:[#allocation2 + $0xe4] sm:$0xff]
    %v229 = vld [vmem:[#allocation2 + $0xec] sm:$0xf]
    %v230 = vld [vmem:[#allocation2 + $0xf0] sm:$0xff]
    %v231 = vld [vmem:[#allocation2 + $0xf8] sm:$0xf]
    %v232 = vld [vmem:[#allocation2 + $0xfc] sm:$0xff]
    %v233 = vld [vmem:[#allocation2 + $0x104] sm:$0xf]
    %v234 = vld [vmem:[#allocation2 + $0x108] sm:$0xff]
    %v235 = vld [vmem:[#allocation2 + $0x110] sm:$0xf]
    %v236 = vld [vmem:[#allocation2 + $0x114] sm:$0xff]
    %v237 = vld [vmem:[#allocation2 + $0x11c] sm:$0xf]
    %v238 = vld [vmem:[#allocation2 + $0x120] sm:$0xff]
    %v239 = vld [vmem:[#allocation2 + $0x128] sm:$0xf]
    %v240 = vld [vmem:[#allocation2 + $0x12c] sm:$0xff]
    %v241 = vld [vmem:[#allocation2 + $0x134] sm:$0xf]
    %v242 = vld [vmem:[#allocation2 + $0x138] sm:$0xff]
    %v243 = vld [vmem:[#allocation2 + $0x140] sm:$0xf]
    %v244 = vld [vmem:[#allocation2 + $0x144] sm:$0xff]
    %v245 = vld [vmem:[#allocation2 + $0x14c] sm:$0xf]
    %v246 = vld [vmem:[#allocation2 + $0x150] sm:$0xff]
    %v247 = vld [vmem:[#allocation2 + $0x158] sm:$0xf]
    %v248 = vld [vmem:[#allocation2 + $0x15c] sm:$0xff]
    %v249 = vld [vmem:[#allocation2 + $0x164] sm:$0xf]
    %v250 = vld [vmem:[#allocation2 + $0x168] sm:$0xff]
    %v251 = vld [vmem:[#allocation2 + $0x170] sm:$0xf]
    %v252 = vld [vmem:[#allocation2 + $0x174] sm:$0xff]
    %v253 = vld [vmem:[#allocation2 + $0x17c] sm:$0xf]
    %v254 = vld [vmem:[#allocation2 + $0x180] sm:$0xff]
    %v255 = vld [vmem:[#allocation2 + $0x188] sm:$0xf]
    %v256 = vld [vmem:[#allocation2 + $0x18c] sm:$0xff]
    %v257 = vld [vmem:[#allocation2 + $0x194] sm:$0xf]
    %v258 = vld [vmem:[#allocation2 + $0x198] sm:$0xff]
    %v259 = vld [vmem:[#allocation2 + $0x1a0] sm:$0xf]
    %v260 = vld [vmem:[#allocation2 + $0x1a4] sm:$0xff]
    %v261 = vld [vmem:[#allocation2 + $0x1ac] sm:$0xf]
    %v262 = vld [vmem:[#allocation2 + $0x1b0] sm:$0xff]
    %v263 = vld [vmem:[#allocation2 + $0x1b8] sm:$0xf]
    %v264 = vld [vmem:[#allocation2 + $0x1bc] sm:$0xff]
    %v265 = vld [vmem:[#allocation2 + $0x1c4] sm:$0xf]
    %v266 = vld [vmem:[#allocation2 + $0x1c8] sm:$0xff]
    %v267 = vld [vmem:[#allocation2 + $0x1d0] sm:$0xf]
    %v268 = vld [vmem:[#allocation2 + $0x1d4] sm:$0xff]
    %v269 = vld [vmem:[#allocation2 + $0x1dc] sm:$0xf]
    %v270 = vld [vmem:[#allocation2 + $0x1e0] sm:$0xff]
    %v271 = vld [vmem:[#allocation2 + $0x1e8] sm:$0xf]
    %v272 = vld [vmem:[#allocation2 + $0x1ec] sm:$0xff]
    %v273 = vld [vmem:[#allocation2 + $0x1f4] sm:$0xf]
    %v274 = vld [vmem:[#allocation2 + $0x1f8] sm:$0xff]
    %v275 = vld [vmem:[#allocation2 + $0x200] sm:$0xf]
    %v276 = vld [vmem:[#allocation2 + $0x204] sm:$0xff]
    %v277 = vld [vmem:[#allocation2 + $0x20c] sm:$0xf]
    %v278 = vld [vmem:[#allocation2 + $0x210] sm:$0xff]
    %v279 = vld [vmem:[#allocation2 + $0x218] sm:$0xf]
    %v280 = vld [vmem:[#allocation2 + $0x21c] sm:$0xff]
    %v281 = vld [vmem:[#allocation2 + $0x224] sm:$0xf]
    %v282 = vld [vmem:[#allocation2 + $0x228] sm:$0xff]
    %v283 = vld [vmem:[#allocation2 + $0x230] sm:$0xf]
    %v284 = vld [vmem:[#allocation2 + $0x234] sm:$0xff]
    %v285 = vld [vmem:[#allocation2 + $0x23c] sm:$0xf]
    %v286 = vld [vmem:[#allocation2 + $0x240] sm:$0xff]
    %v287 = vld [vmem:[#allocation2 + $0x248] sm:$0xf]
    %v288 = vld [vmem:[#allocation2 + $0x24c] sm:$0xff]
    %v289 = vld [vmem:[#allocation2 + $0x254] sm:$0xf]
    %v290 = vld [vmem:[#allocation2 + $0x258] sm:$0xff]
    %v291 = vld [vmem:[#allocation2 + $0x260] sm:$0xf]
    %v292 = vld [vmem:[#allocation2 + $0x264] sm:$0xff]
    %v293 = vld [vmem:[#allocation2 + $0x26c] sm:$0xf]
    %v294 = vld [vmem:[#allocation2 + $0x270] sm:$0xff]
    %v295 = vld [vmem:[#allocation2 + $0x278] sm:$0xf]
    %v296 = vld [vmem:[#allocation2 + $0x27c] sm:$0xff]
    %v297 = vld [vmem:[#allocation2 + $0x284] sm:$0xf]
    %v298 = vld [vmem:[#allocation2 + $0x288] sm:$0xff]
    %v299 = vld [vmem:[#allocation2 + $0x290] sm:$0xf]
    %v300 = vld [vmem:[#allocation2 + $0x294] sm:$0xff]
    %v301 = vld [vmem:[#allocation2 + $0x29c] sm:$0xf]
    %v302 = vld [vmem:[#allocation2 + $0x2a0] sm:$0xff]
    %v303 = vld [vmem:[#allocation2 + $0x2a8] sm:$0xf]
    %v304 = vld [vmem:[#allocation2 + $0x2ac] sm:$0xff]
    %v305 = vld [vmem:[#allocation2 + $0x2b4] sm:$0xf]
    %v306 = vld [vmem:[#allocation2 + $0x2b8] sm:$0xff]
    %v307 = vld [vmem:[#allocation2 + $0x2c0] sm:$0xf]
    %v308 = vld [vmem:[#allocation2 + $0x2c4] sm:$0xff]
    %v309 = vld [vmem:[#allocation2 + $0x2cc] sm:$0xf]
    %v310 = vld [vmem:[#allocation2 + $0x2d0] sm:$0xff]
    %v311 = vld [vmem:[#allocation2 + $0x2d8] sm:$0xf]
    %v312 = vld [vmem:[#allocation2 + $0x2dc] sm:$0xff]
    %v313 = vld [vmem:[#allocation2 + $0x2e4] sm:$0xf]
    %v314 = vld [vmem:[#allocation2 + $0x2e8] sm:$0xff]
    %v315 = vld [vmem:[#allocation2 + $0x2f0] sm:$0xf]
    %v316 = vld [vmem:[#allocation2 + $0x2f4] sm:$0xff]
    %v317 = vld [vmem:[#allocation2 + $0x2fc] sm:$0xf]
    %v318 = vld [vmem:[%s4] sm:$0x7]
    %v320 = vlaneseq
    %v321 = vshrl.u32 %v320, 7
    %v322 = vsub.s32 0, %v321
    %v323 = vrot.slane %v318, %v322
    %v324 = vlaneseq
    %v325 = vshrl.u32 %v324, 7
    %v326 = vsub.s32 1, %v325
    %v327 = vrot.slane %v318, %v326
    %v328 = vlaneseq
    %v329 = vshrl.u32 %v328, 7
    %v330 = vsub.s32 2, %v329
    %v331 = vrot.slane %v318, %v330
    %v463 = vunpack.c.l.b16 %v190
    %v464 = vunpack.c.h.b16 %v190
    %v465 = vunpack.c.l.b16 %v191
    %v466 = vunpack.c.l.b16 %v192
    %v467 = vunpack.c.h.b16 %v192
    %v468 = vunpack.c.l.b16 %v193
    %v469 = vunpack.c.l.b16 %v194
    %v470 = vunpack.c.h.b16 %v194
    %v471 = vunpack.c.l.b16 %v195
    %v472 = vunpack.c.l.b16 %v196
    %v473 = vunpack.c.h.b16 %v196
    %v474 = vunpack.c.l.b16 %v197
    %v475 = vunpack.c.l.b16 %v198
    %v476 = vunpack.c.h.b16 %v198
    %v477 = vunpack.c.l.b16 %v199
    %v478 = vunpack.c.l.b16 %v200
    %v479 = vunpack.c.h.b16 %v200
    %v480 = vunpack.c.l.b16 %v201
    %v481 = vunpack.c.l.b16 %v202
    %v482 = vunpack.c.h.b16 %v202
    %v483 = vunpack.c.l.b16 %v203
    %v484 = vunpack.c.l.b16 %v204
    %v485 = vunpack.c.h.b16 %v204
    %v486 = vunpack.c.l.b16 %v205
    %v487 = vunpack.c.l.b16 %v206
    %v488 = vunpack.c.h.b16 %v206
    %v489 = vunpack.c.l.b16 %v207
    %v490 = vunpack.c.l.b16 %v208
    %v491 = vunpack.c.h.b16 %v208
    %v492 = vunpack.c.l.b16 %v209
    %v493 = vunpack.c.l.b16 %v210
    %v494 = vunpack.c.h.b16 %v210
    %v495 = vunpack.c.l.b16 %v211
    %v496 = vunpack.c.l.b16 %v212
    %v497 = vunpack.c.h.b16 %v212
    %v498 = vunpack.c.l.b16 %v213
    %v499 = vunpack.c.l.b16 %v214
    %v500 = vunpack.c.h.b16 %v214
    %v501 = vunpack.c.l.b16 %v215
    %v502 = vunpack.c.l.b16 %v216
    %v503 = vunpack.c.h.b16 %v216
    %v504 = vunpack.c.l.b16 %v217
    %v505 = vunpack.c.l.b16 %v218
    %v506 = vunpack.c.h.b16 %v218
    %v507 = vunpack.c.l.b16 %v219
    %v508 = vunpack.c.l.b16 %v220
    %v509 = vunpack.c.h.b16 %v220
    %v510 = vunpack.c.l.b16 %v221
    %v511 = vunpack.c.l.b16 %v222
    %v512 = vunpack.c.h.b16 %v222
    %v513 = vunpack.c.l.b16 %v223
    %v514 = vunpack.c.l.b16 %v224
    %v515 = vunpack.c.h.b16 %v224
    %v516 = vunpack.c.l.b16 %v225
    %v517 = vunpack.c.l.b16 %v226
    %v518 = vunpack.c.h.b16 %v226
    %v519 = vunpack.c.l.b16 %v227
    %v520 = vunpack.c.l.b16 %v228
    %v521 = vunpack.c.h.b16 %v228
    %v522 = vunpack.c.l.b16 %v229
    %v523 = vunpack.c.l.b16 %v230
    %v524 = vunpack.c.h.b16 %v230
    %v525 = vunpack.c.l.b16 %v231
    %v526 = vunpack.c.l.b16 %v232
    %v527 = vunpack.c.h.b16 %v232
    %v528 = vunpack.c.l.b16 %v233
    %v529 = vunpack.c.l.b16 %v234
    %v530 = vunpack.c.h.b16 %v234
    %v531 = vunpack.c.l.b16 %v235
    %v532 = vunpack.c.l.b16 %v236
    %v533 = vunpack.c.h.b16 %v236
    %v534 = vunpack.c.l.b16 %v237
    %v535 = vunpack.c.l.b16 %v238
    %v536 = vunpack.c.h.b16 %v238
    %v537 = vunpack.c.l.b16 %v239
    %v538 = vunpack.c.l.b16 %v240
    %v539 = vunpack.c.h.b16 %v240
    %v540 = vunpack.c.l.b16 %v241
    %v541 = vunpack.c.l.b16 %v242
    %v542 = vunpack.c.h.b16 %v242
    %v543 = vunpack.c.l.b16 %v243
    %v544 = vunpack.c.l.b16 %v244
    %v545 = vunpack.c.h.b16 %v244
    %v546 = vunpack.c.l.b16 %v245
    %v547 = vunpack.c.l.b16 %v246
    %v548 = vunpack.c.h.b16 %v246
    %v549 = vunpack.c.l.b16 %v247
    %v550 = vunpack.c.l.b16 %v248
    %v551 = vunpack.c.h.b16 %v248
    %v552 = vunpack.c.l.b16 %v249
    %v553 = vunpack.c.l.b16 %v250
    %v554 = vunpack.c.h.b16 %v250
    %v555 = vunpack.c.l.b16 %v251
    %v556 = vunpack.c.l.b16 %v252
    %v557 = vunpack.c.h.b16 %v252
    %v558 = vunpack.c.l.b16 %v253
    %v559 = vunpack.c.l.b16 %v254
    %v560 = vunpack.c.h.b16 %v254
    %v561 = vunpack.c.l.b16 %v255
    %v562 = vunpack.c.l.b16 %v256
    %v563 = vunpack.c.h.b16 %v256
    %v564 = vunpack.c.l.b16 %v257
    %v565 = vunpack.c.l.b16 %v258
    %v566 = vunpack.c.h.b16 %v258
    %v567 = vunpack.c.l.b16 %v259
    %v568 = vunpack.c.l.b16 %v260
    %v569 = vunpack.c.h.b16 %v260
    %v570 = vunpack.c.l.b16 %v261
    %v571 = vunpack.c.l.b16 %v262
    %v572 = vunpack.c.h.b16 %v262
    %v573 = vunpack.c.l.b16 %v263
    %v574 = vunpack.c.l.b16 %v264
    %v575 = vunpack.c.h.b16 %v264
    %v576 = vunpack.c.l.b16 %v265
    %v577 = vunpack.c.l.b16 %v266
    %v578 = vunpack.c.h.b16 %v266
    %v579 = vunpack.c.l.b16 %v267
    %v580 = vunpack.c.l.b16 %v268
    %v581 = vunpack.c.h.b16 %v268
    %v582 = vunpack.c.l.b16 %v269
    %v583 = vunpack.c.l.b16 %v270
    %v584 = vunpack.c.h.b16 %v270
    %v585 = vunpack.c.l.b16 %v271
    %v586 = vunpack.c.l.b16 %v272
    %v587 = vunpack.c.h.b16 %v272
    %v588 = vunpack.c.l.b16 %v273
    %v589 = vunpack.c.l.b16 %v274
    %v590 = vunpack.c.h.b16 %v274
    %v591 = vunpack.c.l.b16 %v275
    %v592 = vunpack.c.l.b16 %v276
    %v593 = vunpack.c.h.b16 %v276
    %v594 = vunpack.c.l.b16 %v277
    %v595 = vunpack.c.l.b16 %v278
    %v596 = vunpack.c.h.b16 %v278
    %v597 = vunpack.c.l.b16 %v279
    %v598 = vunpack.c.l.b16 %v280
    %v599 = vunpack.c.h.b16 %v280
    %v600 = vunpack.c.l.b16 %v281
    %v601 = vunpack.c.l.b16 %v282
    %v602 = vunpack.c.h.b16 %v282
    %v603 = vunpack.c.l.b16 %v283
    %v604 = vunpack.c.l.b16 %v284
    %v605 = vunpack.c.h.b16 %v284
    %v606 = vunpack.c.l.b16 %v285
    %v607 = vunpack.c.l.b16 %v286
    %v608 = vunpack.c.h.b16 %v286
    %v609 = vunpack.c.l.b16 %v287
    %v610 = vunpack.c.l.b16 %v288
    %v611 = vunpack.c.h.b16 %v288
    %v612 = vunpack.c.l.b16 %v289
    %v613 = vunpack.c.l.b16 %v290
    %v614 = vunpack.c.h.b16 %v290
    %v615 = vunpack.c.l.b16 %v291
    %v616 = vunpack.c.l.b16 %v292
    %v617 = vunpack.c.h.b16 %v292
    %v618 = vunpack.c.l.b16 %v293
    %v619 = vunpack.c.l.b16 %v294
    %v620 = vunpack.c.h.b16 %v294
    %v621 = vunpack.c.l.b16 %v295
    %v622 = vunpack.c.l.b16 %v296
    %v623 = vunpack.c.h.b16 %v296
    %v624 = vunpack.c.l.b16 %v297
    %v625 = vunpack.c.l.b16 %v298
    %v626 = vunpack.c.h.b16 %v298
    %v627 = vunpack.c.l.b16 %v299
    %v628 = vunpack.c.l.b16 %v300
    %v629 = vunpack.c.h.b16 %v300
    %v630 = vunpack.c.l.b16 %v301
    %v631 = vunpack.c.l.b16 %v302
    %v632 = vunpack.c.h.b16 %v302
    %v633 = vunpack.c.l.b16 %v303
    %v634 = vunpack.c.l.b16 %v304
    %v635 = vunpack.c.h.b16 %v304
    %v636 = vunpack.c.l.b16 %v305
    %v637 = vunpack.c.l.b16 %v306
    %v638 = vunpack.c.h.b16 %v306
    %v639 = vunpack.c.l.b16 %v307
    %v640 = vunpack.c.l.b16 %v308
    %v641 = vunpack.c.h.b16 %v308
    %v642 = vunpack.c.l.b16 %v309
    %v643 = vunpack.c.l.b16 %v310
    %v644 = vunpack.c.h.b16 %v310
    %v645 = vunpack.c.l.b16 %v311
    %v646 = vunpack.c.l.b16 %v312
    %v647 = vunpack.c.h.b16 %v312
    %v648 = vunpack.c.l.b16 %v313
    %v649 = vunpack.c.l.b16 %v314
    %v650 = vunpack.c.h.b16 %v314
    %v651 = vunpack.c.l.b16 %v315
    %v652 = vunpack.c.l.b16 %v316
    %v653 = vunpack.c.h.b16 %v316
    %v654 = vunpack.c.l.b16 %v317
    %v655 = vpack.c.b16 %v466, %v463
    %v656 = vpack.c.b16 %v467, %v464
    %v657 = vpack.c.b16 %v468, %v465
    %v658 = vpack.c.b16 %v472, %v469
    %v659 = vpack.c.b16 %v473, %v470
    %v660 = vpack.c.b16 %v474, %v471
    %v661 = vpack.c.b16 %v478, %v475
    %v662 = vpack.c.b16 %v479, %v476
    %v663 = vpack.c.b16 %v480, %v477
    %v664 = vpack.c.b16 %v484, %v481
    %v665 = vpack.c.b16 %v485, %v482
    %v666 = vpack.c.b16 %v486, %v483
    %v667 = vpack.c.b16 %v490, %v487
    %v668 = vpack.c.b16 %v491, %v488
    %v669 = vpack.c.b16 %v492, %v489
    %v670 = vpack.c.b16 %v496, %v493
    %v671 = vpack.c.b16 %v497, %v494
    %v672 = vpack.c.b16 %v498, %v495
    %v673 = vpack.c.b16 %v502, %v499
    %v674 = vpack.c.b16 %v503, %v500
    %v675 = vpack.c.b16 %v504, %v501
    %v676 = vpack.c.b16 %v508, %v505
    %v677 = vpack.c.b16 %v509, %v506
    %v678 = vpack.c.b16 %v510, %v507
    %v679 = vpack.c.b16 %v514, %v511
    %v680 = vpack.c.b16 %v515, %v512
    %v681 = vpack.c.b16 %v516, %v513
    %v682 = vpack.c.b16 %v520, %v517
    %v683 = vpack.c.b16 %v521, %v518
    %v684 = vpack.c.b16 %v522, %v519
    %v685 = vpack.c.b16 %v526, %v523
    %v686 = vpack.c.b16 %v527, %v524
    %v687 = vpack.c.b16 %v528, %v525
    %v688 = vpack.c.b16 %v532, %v529
    %v689 = vpack.c.b16 %v533, %v530
    %v690 = vpack.c.b16 %v534, %v531
    %v691 = vpack.c.b16 %v538, %v535
    %v692 = vpack.c.b16 %v539, %v536
    %v693 = vpack.c.b16 %v540, %v537
    %v694 = vpack.c.b16 %v544, %v541
    %v695 = vpack.c.b16 %v545, %v542
    %v696 = vpack.c.b16 %v546, %v543
    %v697 = vpack.c.b16 %v550, %v547
    %v698 = vpack.c.b16 %v551, %v548
    %v699 = vpack.c.b16 %v552, %v549
    %v700 = vpack.c.b16 %v556, %v553
    %v701 = vpack.c.b16 %v557, %v554
    %v702 = vpack.c.b16 %v558, %v555
    %v703 = vpack.c.b16 %v562, %v559
    %v704 = vpack.c.b16 %v563, %v560
    %v705 = vpack.c.b16 %v564, %v561
    %v706 = vpack.c.b16 %v568, %v565
    %v707 = vpack.c.b16 %v569, %v566
    %v708 = vpack.c.b16 %v570, %v567
    %v709 = vpack.c.b16 %v574, %v571
    %v710 = vpack.c.b16 %v575, %v572
    %v711 = vpack.c.b16 %v576, %v573
    %v712 = vpack.c.b16 %v580, %v577
    %v713 = vpack.c.b16 %v581, %v578
    %v714 = vpack.c.b16 %v582, %v579
    %v715 = vpack.c.b16 %v586, %v583
    %v716 = vpack.c.b16 %v587, %v584
    %v717 = vpack.c.b16 %v588, %v585
    %v718 = vpack.c.b16 %v592, %v589
    %v719 = vpack.c.b16 %v593, %v590
    %v720 = vpack.c.b16 %v594, %v591
    %v721 = vpack.c.b16 %v598, %v595
    %v722 = vpack.c.b16 %v599, %v596
    %v723 = vpack.c.b16 %v600, %v597
    %v724 = vpack.c.b16 %v604, %v601
    %v725 = vpack.c.b16 %v605, %v602
    %v726 = vpack.c.b16 %v606, %v603
    %v727 = vpack.c.b16 %v610, %v607
    %v728 = vpack.c.b16 %v611, %v608
    %v729 = vpack.c.b16 %v612, %v609
    %v730 = vpack.c.b16 %v616, %v613
    %v731 = vpack.c.b16 %v617, %v614
    %v732 = vpack.c.b16 %v618, %v615
    %v733 = vpack.c.b16 %v622, %v619
    %v734 = vpack.c.b16 %v623, %v620
    %v735 = vpack.c.b16 %v624, %v621
    %v736 = vpack.c.b16 %v628, %v625
    %v737 = vpack.c.b16 %v629, %v626
    %v738 = vpack.c.b16 %v630, %v627
    %v739 = vpack.c.b16 %v634, %v631
    %v740 = vpack.c.b16 %v635, %v632
    %v741 = vpack.c.b16 %v636, %v633
    %v742 = vpack.c.b16 %v640, %v637
    %v743 = vpack.c.b16 %v641, %v638
    %v744 = vpack.c.b16 %v642, %v639
    %v745 = vpack.c.b16 %v646, %v643
    %v746 = vpack.c.b16 %v647, %v644
    %v747 = vpack.c.b16 %v648, %v645
    %v748 = vpack.c.b16 %v652, %v649
    %v749 = vpack.c.b16 %v653, %v650
    %v750 = vpack.c.b16 %v654, %v651
    %847 = vmatprep.subr.bf16.mxu0 %v656
    %848 = vmatpush1.bf16.msra.mxu0 %v655
    %849 = vmatprep.subr.bf16.mxu0 %v659
    %850 = vmatpush1.bf16.msra.mxu0 %v658
    %851 = vmatprep.subr.bf16.mxu0 %v662
    %852 = vmatpush1.bf16.msra.mxu0 %v661
    %853 = vmatprep.subr.bf16.mxu0 %v665
    %854 = vmatpush1.bf16.msra.mxu0 %v664
    %855 = vmatprep.subr.bf16.mxu0 %v668
    %856 = vmatpush1.bf16.msra.mxu0 %v667
    %857 = vmatprep.subr.bf16.mxu0 %v671
    %858 = vmatpush1.bf16.msra.mxu0 %v670
    %859 = vmatprep.subr.bf16.mxu0 %v674
    %860 = vmatpush1.bf16.msra.mxu0 %v673
    %861 = vmatprep.subr.bf16.mxu0 %v677
    %862 = vmatpush1.bf16.msra.mxu0 %v676
    %863 = vmatprep.subr.bf16.mxu0 %v680
    %864 = vmatpush1.bf16.msra.mxu0 %v679
    %865 = vmatprep.subr.bf16.mxu0 %v683
    %866 = vmatpush1.bf16.msra.mxu0 %v682
    %867 = vmatprep.subr.bf16.mxu0 %v686
    %868 = vmatpush1.bf16.msra.mxu0 %v685
    %869 = vmatprep.subr.bf16.mxu0 %v689
    %870 = vmatpush1.bf16.msra.mxu0 %v688
    %871 = vmatprep.subr.bf16.mxu0 %v692
    %872 = vmatpush1.bf16.msra.mxu0 %v691
    %873 = vmatprep.subr.bf16.mxu0 %v695
    %874 = vmatpush1.bf16.msra.mxu0 %v694
    %875 = vmatprep.subr.bf16.mxu0 %v698
    %876 = vmatpush1.bf16.msra.mxu0 %v697
    %877 = vmatprep.subr.bf16.mxu0 %v701
    %878 = vmatpush1.bf16.msra.mxu0 %v700
    %879 = vmatprep.mubr.bf16.mxu0 %v187
    %880 = vmatmul.mubr.bf16.gmra.mrb[0].mxu0 %v186
    %v881 = vpop.f32.mrb[0].mxu0
    %v882 = vadd.f32 %v323, %v881
    %v883 = vpop.f32.mrb[0].mxu0
    %v884 = vadd.f32 %v327, %v883
    %v885 = vpop.f32.mrb[0].mxu0
    %v886 = vpop.f32.mrb[0].mxu0
    %887 = vdwg.mxu0
    %888 = vmatprep.subr.bf16.mxu0 %v704
    %889 = vmatpush1.bf16.msra.mxu0 %v703
    %890 = vmatprep.subr.bf16.mxu0 %v707
    %891 = vmatpush1.bf16.msra.mxu0 %v706
    %892 = vmatprep.subr.bf16.mxu0 %v710
    %893 = vmatpush1.bf16.msra.mxu0 %v709
    %894 = vmatprep.subr.bf16.mxu0 %v713
    %895 = vmatpush1.bf16.msra.mxu0 %v712
    %896 = vmatprep.subr.bf16.mxu0 %v716
    %897 = vmatpush1.bf16.msra.mxu0 %v715
    %898 = vmatprep.subr.bf16.mxu0 %v719
    %899 = vmatpush1.bf16.msra.mxu0 %v718
    %900 = vmatprep.subr.bf16.mxu0 %v722
    %901 = vmatpush1.bf16.msra.mxu0 %v721
    %902 = vmatprep.subr.bf16.mxu0 %v725
    %903 = vmatpush1.bf16.msra.mxu0 %v724
    %904 = vmatprep.subr.bf16.mxu0 %v728
    %905 = vmatpush1.bf16.msra.mxu0 %v727
    %906 = vmatprep.subr.bf16.mxu0 %v731
    %907 = vmatpush1.bf16.msra.mxu0 %v730
    %908 = vmatprep.subr.bf16.mxu0 %v734
    %909 = vmatpush1.bf16.msra.mxu0 %v733
    %910 = vmatprep.subr.bf16.mxu0 %v737
    %911 = vmatpush1.bf16.msra.mxu0 %v736
    %912 = vmatprep.subr.bf16.mxu0 %v740
    %913 = vmatpush1.bf16.msra.mxu0 %v739
    %914 = vmatprep.subr.bf16.mxu0 %v743
    %915 = vmatpush1.bf16.msra.mxu0 %v742
    %916 = vmatprep.subr.bf16.mxu0 %v746
    %917 = vmatpush1.bf16.msra.mxu0 %v745
    %918 = vmatprep.subr.bf16.mxu0 %v749
    %919 = vmatpush1.bf16.msra.mxu0 %v748
    %920 = vmatprep.mubr.bf16.mxu0 %v189
    %921 = vmatmul.mubr.bf16.gmra.mrb[0].mxu0 %v188
    %v922 = vpop.f32.mrb[0].mxu0
    %v923 = vadd.f32 %v882, %v922
    %v924 = vpop.f32.mrb[0].mxu0
    %v925 = vadd.f32 %v884, %v924
    %v926 = vpop.f32.mrb[0].mxu0
    %v927 = vpop.f32.mrb[0].mxu0
    %928 = vdwg.mxu0
    %929 = vmatprep.subr.bf16.mxu0 0
    %930 = vmatpush1.bf16.msra.mxu0 %v657
    %931 = vmatprep.subr.bf16.mxu0 0
    %932 = vmatpush1.bf16.msra.mxu0 %v660
    %933 = vmatprep.subr.bf16.mxu0 0
    %934 = vmatpush1.bf16.msra.mxu0 %v663
    %935 = vmatprep.subr.bf16.mxu0 0
    %936 = vmatpush1.bf16.msra.mxu0 %v666
    %937 = vmatprep.subr.bf16.mxu0 0
    %938 = vmatpush1.bf16.msra.mxu0 %v669
    %939 = vmatprep.subr.bf16.mxu0 0
    %940 = vmatpush1.bf16.msra.mxu0 %v672
    %941 = vmatprep.subr.bf16.mxu0 0
    %942 = vmatpush1.bf16.msra.mxu0 %v675
    %943 = vmatprep.subr.bf16.mxu0 0
    %944 = vmatpush1.bf16.msra.mxu0 %v678
    %945 = vmatprep.subr.bf16.mxu0 0
    %946 = vmatpush1.bf16.msra.mxu0 %v681
    %947 = vmatprep.subr.bf16.mxu0 0
    %948 = vmatpush1.bf16.msra.mxu0 %v684
    %949 = vmatprep.subr.bf16.mxu0 0
    %950 = vmatpush1.bf16.msra.mxu0 %v687
    %951 = vmatprep.subr.bf16.mxu0 0
    %952 = vmatpush1.bf16.msra.mxu0 %v690
    %953 = vmatprep.subr.bf16.mxu0 0
    %954 = vmatpush1.bf16.msra.mxu0 %v693
    %955 = vmatprep.subr.bf16.mxu0 0
    %956 = vmatpush1.bf16.msra.mxu0 %v696
    %957 = vmatprep.subr.bf16.mxu0 0
    %958 = vmatpush1.bf16.msra.mxu0 %v699
    %959 = vmatprep.subr.bf16.mxu0 0
    %960 = vmatpush1.bf16.msra.mxu0 %v702
    %961 = vmatprep.mubr.bf16.mxu0 %v187
    %962 = vmatmul.mubr.bf16.gmra.mrb[0].mxu0 %v186
    %v963 = vpop.f32.mrb[0].mxu0
    %v964 = vadd.f32 %v331, %v963
    %v965 = vpop.f32.mrb[0].mxu0
    %v966 = vpop.f32.mrb[0].mxu0
    %v967 = vpop.f32.mrb[0].mxu0
    %968 = vdwg.mxu0
    %969 = vmatprep.subr.bf16.mxu0 0
    %970 = vmatpush1.bf16.msra.mxu0 %v705
    %971 = vmatprep.subr.bf16.mxu0 0
    %972 = vmatpush1.bf16.msra.mxu0 %v708
    %973 = vmatprep.subr.bf16.mxu0 0
    %974 = vmatpush1.bf16.msra.mxu0 %v711
    %975 = vmatprep.subr.bf16.mxu0 0
    %976 = vmatpush1.bf16.msra.mxu0 %v714
    %977 = vmatprep.subr.bf16.mxu0 0
    %978 = vmatpush1.bf16.msra.mxu0 %v717
    %979 = vmatprep.subr.bf16.mxu0 0
    %980 = vmatpush1.bf16.msra.mxu0 %v720
    %981 = vmatprep.subr.bf16.mxu0 0
    %982 = vmatpush1.bf16.msra.mxu0 %v723
    %983 = vmatprep.subr.bf16.mxu0 0
    %984 = vmatpush1.bf16.msra.mxu0 %v726
    %985 = vmatprep.subr.bf16.mxu0 0
    %986 = vmatpush1.bf16.msra.mxu0 %v729
    %987 = vmatprep.subr.bf16.mxu0 0
    %988 = vmatpush1.bf16.msra.mxu0 %v732
    %989 = vmatprep.subr.bf16.mxu0 0
    %990 = vmatpush1.bf16.msra.mxu0 %v735
    %991 = vmatprep.subr.bf16.mxu0 0
    %992 = vmatpush1.bf16.msra.mxu0 %v738
    %993 = vmatprep.subr.bf16.mxu0 0
    %994 = vmatpush1.bf16.msra.mxu0 %v741
    %995 = vmatprep.subr.bf16.mxu0 0
    %996 = vmatpush1.bf16.msra.mxu0 %v744
    %997 = vmatprep.subr.bf16.mxu0 0
    %998 = vmatpush1.bf16.msra.mxu0 %v747
    %999 = vmatprep.subr.bf16.mxu0 0
    %1000 = vmatpush1.bf16.msra.mxu0 %v750
    %1001 = vmatprep.mubr.bf16.mxu0 %v189
    %1002 = vmatmul.mubr.bf16.gmra.mrb[0].mxu0 %v188
    %v1003 = vpop.f32.mrb[0].mxu0
    %v1004 = vadd.f32 %v964, %v1003
    %v1005 = vpop.f32.mrb[0].mxu0
    %v1006 = vpop.f32.mrb[0].mxu0
    %v1007 = vpop.f32.mrb[0].mxu0
    %1008 = vdwg.mxu0
    %v1009 = vmax.f32 %v923, 0.0
    %v1010 = vmax.f32 %v925, 0.0
    %v1011 = vmax.f32 %v1004, 0.0
    %v1012 = vpack.c.bf16 %v1009, %v1009
    %v1013 = vpack.c.bf16 %v1010, %v1010
    %v1014 = vpack.c.bf16 %v1011, %v1011
    %v1015 = vld [vmem:[%s5] sm:$0xf]
    %v1016 = vld [vmem:[%s5 + $0x4] sm:$0xf]
    %v1017 = vld [vmem:[%s5 + $0x8] sm:$0xf]
    %v1018 = vld [vmem:[%s5 + $0xc] sm:$0xf]
    %v1019 = vld [vmem:[%s5 + $0x10] sm:$0xf]
    %v1020 = vld [vmem:[%s5 + $0x14] sm:$0xf]
    %v1021 = vld [vmem:[%s5 + $0x18] sm:$0xf]
    %v1022 = vld [vmem:[%s5 + $0x1c] sm:$0xf]
    %v1023 = vld [vmem:[%s5 + $0x20] sm:$0xf]
    %v1024 = vld [vmem:[%s5 + $0x24] sm:$0xf]
    %v1025 = vld [vmem:[%s5 + $0x28] sm:$0xf]
    %v1026 = vld [vmem:[%s5 + $0x2c] sm:$0xf]
    %v1027 = vld [vmem:[%s5 + $0x30] sm:$0xf]
    %v1028 = vld [vmem:[%s5 + $0x34] sm:$0xf]
    %v1029 = vld [vmem:[%s5 + $0x38] sm:$0xf]
    %v1030 = vld [vmem:[%s5 + $0x3c] sm:$0xf]
    %v1031 = vld [vmem:[%s5 + $0x40] sm:$0xf]
    %v1032 = vld [vmem:[%s5 + $0x44] sm:$0xf]
    %v1033 = vld [vmem:[%s5 + $0x48] sm:$0xf]
    %v1034 = vld [vmem:[%s5 + $0x4c] sm:$0xf]
    %v1035 = vld [vmem:[%s5 + $0x50] sm:$0xf]
    %v1036 = vld [vmem:[%s5 + $0x54] sm:$0xf]
    %v1037 = vld [vmem:[%s5 + $0x58] sm:$0xf]
    %v1038 = vld [vmem:[%s5 + $0x5c] sm:$0xf]
    %v1039 = vld [vmem:[%s5 + $0x60] sm:$0xf]
    %v1040 = vld [vmem:[%s5 + $0x64] sm:$0xf]
    %v1041 = vld [vmem:[%s5 + $0x68] sm:$0xf]
    %v1042 = vld [vmem:[%s5 + $0x6c] sm:$0xf]
    %v1043 = vld [vmem:[%s5 + $0x70] sm:$0xf]
    %v1044 = vld [vmem:[%s5 + $0x74] sm:$0xf]
    %v1045 = vld [vmem:[%s5 + $0x78] sm:$0xf]
    %v1046 = vld [vmem:[%s5 + $0x7c] sm:$0xf]
    %v1047 = vld [vmem:[%s5 + $0x80] sm:$0xf]
    %v1048 = vld [vmem:[%s5 + $0x84] sm:$0xf]
    %v1049 = vld [vmem:[%s5 + $0x88] sm:$0xf]
    %v1050 = vld [vmem:[%s5 + $0x8c] sm:$0xf]
    %v1051 = vld [vmem:[%s5 + $0x90] sm:$0xf]
    %v1052 = vld [vmem:[%s5 + $0x94] sm:$0xf]
    %v1053 = vld [vmem:[%s5 + $0x98] sm:$0xf]
    %v1054 = vld [vmem:[%s5 + $0x9c] sm:$0xf]
    %v1055 = vld [vmem:[%s5 + $0xa0] sm:$0xf]
    %v1056 = vld [vmem:[%s5 + $0xa4] sm:$0xf]
    %v1057 = vld [vmem:[%s5 + $0xa8] sm:$0xf]
    %v1058 = vld [vmem:[%s5 + $0xac] sm:$0xf]
    %v1059 = vld [vmem:[%s5 + $0xb0] sm:$0xf]
    %v1060 = vld [vmem:[%s5 + $0xb4] sm:$0xf]
    %v1061 = vld [vmem:[%s5 + $0xb8] sm:$0xf]
    %v1062 = vld [vmem:[%s5 + $0xbc] sm:$0xf]
    %v1063 = vld [vmem:[%s6] sm:$0x1]
    %v1065 = vlaneseq
    %v1066 = vshrl.u32 %v1065, 7
    %v1067 = vsub.s32 0, %v1066
    %v1068 = vrot.slane %v1063, %v1067
    %v1118 = vunpack.c.l.b16 %v1015
    %v1119 = vunpack.c.l.b16 %v1016
    %v1120 = vunpack.c.l.b16 %v1017
    %v1121 = vunpack.c.l.b16 %v1018
    %v1122 = vunpack.c.l.b16 %v1019
    %v1123 = vunpack.c.l.b16 %v1020
    %v1124 = vunpack.c.l.b16 %v1021
    %v1125 = vunpack.c.l.b16 %v1022
    %v1126 = vunpack.c.l.b16 %v1023
    %v1127 = vunpack.c.l.b16 %v1024
    %v1128 = vunpack.c.l.b16 %v1025
    %v1129 = vunpack.c.l.b16 %v1026
    %v1130 = vunpack.c.l.b16 %v1027
    %v1131 = vunpack.c.l.b16 %v1028
    %v1132 = vunpack.c.l.b16 %v1029
    %v1133 = vunpack.c.l.b16 %v1030
    %v1134 = vunpack.c.l.b16 %v1031
    %v1135 = vunpack.c.l.b16 %v1032
    %v1136 = vunpack.c.l.b16 %v1033
    %v1137 = vunpack.c.l.b16 %v1034
    %v1138 = vunpack.c.l.b16 %v1035
    %v1139 = vunpack.c.l.b16 %v1036
    %v1140 = vunpack.c.l.b16 %v1037
    %v1141 = vunpack.c.l.b16 %v1038
    %v1142 = vunpack.c.l.b16 %v1039
    %v1143 = vunpack.c.l.b16 %v1040
    %v1144 = vunpack.c.l.b16 %v1041
    %v1145 = vunpack.c.l.b16 %v1042
    %v1146 = vunpack.c.l.b16 %v1043
    %v1147 = vunpack.c.l.b16 %v1044
    %v1148 = vunpack.c.l.b16 %v1045
    %v1149 = vunpack.c.l.b16 %v1046
    %v1150 = vunpack.c.l.b16 %v1047
    %v1151 = vunpack.c.l.b16 %v1048
    %v1152 = vunpack.c.l.b16 %v1049
    %v1153 = vunpack.c.l.b16 %v1050
    %v1154 = vunpack.c.l.b16 %v1051
    %v1155 = vunpack.c.l.b16 %v1052
    %v1156 = vunpack.c.l.b16 %v1053
    %v1157 = vunpack.c.l.b16 %v1054
    %v1158 = vunpack.c.l.b16 %v1055
    %v1159 = vunpack.c.l.b16 %v1056
    %v1160 = vunpack.c.l.b16 %v1057
    %v1161 = vunpack.c.l.b16 %v1058
    %v1162 = vunpack.c.l.b16 %v1059
    %v1163 = vunpack.c.l.b16 %v1060
    %v1164 = vunpack.c.l.b16 %v1061
    %v1165 = vunpack.c.l.b16 %v1062
    %v1166 = vpack.c.b16 %v1119, %v1118
    %v1167 = vpack.c.b16 %v1121, %v1120
    %v1168 = vpack.c.b16 %v1123, %v1122
    %v1169 = vpack.c.b16 %v1125, %v1124
    %v1170 = vpack.c.b16 %v1127, %v1126
    %v1171 = vpack.c.b16 %v1129, %v1128
    %v1172 = vpack.c.b16 %v1131, %v1130
    %v1173 = vpack.c.b16 %v1133, %v1132
    %v1174 = vpack.c.b16 %v1135, %v1134
    %v1175 = vpack.c.b16 %v1137, %v1136
    %v1176 = vpack.c.b16 %v1139, %v1138
    %v1177 = vpack.c.b16 %v1141, %v1140
    %v1178 = vpack.c.b16 %v1143, %v1142
    %v1179 = vpack.c.b16 %v1145, %v1144
    %v1180 = vpack.c.b16 %v1147, %v1146
    %v1181 = vpack.c.b16 %v1149, %v1148
    %v1182 = vpack.c.b16 %v1151, %v1150
    %v1183 = vpack.c.b16 %v1153, %v1152
    %v1184 = vpack.c.b16 %v1155, %v1154
    %v1185 = vpack.c.b16 %v1157, %v1156
    %v1186 = vpack.c.b16 %v1159, %v1158
    %v1187 = vpack.c.b16 %v1161, %v1160
    %v1188 = vpack.c.b16 %v1163, %v1162
    %v1189 = vpack.c.b16 %v1165, %v1164
    %1214 = vmatprep.subr.bf16.mxu0 0
    %1215 = vmatpush1.bf16.msra.mxu0 %v1166
    %1216 = vmatprep.subr.bf16.mxu0 0
    %1217 = vmatpush1.bf16.msra.mxu0 %v1167
    %1218 = vmatprep.subr.bf16.mxu0 0
    %1219 = vmatpush1.bf16.msra.mxu0 %v1168
    %1220 = vmatprep.subr.bf16.mxu0 0
    %1221 = vmatpush1.bf16.msra.mxu0 %v1169
    %1222 = vmatprep.subr.bf16.mxu0 0
    %1223 = vmatpush1.bf16.msra.mxu0 %v1170
    %1224 = vmatprep.subr.bf16.mxu0 0
    %1225 = vmatpush1.bf16.msra.mxu0 %v1171
    %1226 = vmatprep.subr.bf16.mxu0 0
    %1227 = vmatpush1.bf16.msra.mxu0 %v1172
    %1228 = vmatprep.subr.bf16.mxu0 0
    %1229 = vmatpush1.bf16.msra.mxu0 %v1173
    %1230 = vmatprep.subr.bf16.mxu0 0
    %1231 = vmatpush1.bf16.msra.mxu0 %v1174
    %1232 = vmatprep.subr.bf16.mxu0 0
    %1233 = vmatpush1.bf16.msra.mxu0 %v1175
    %1234 = vmatprep.subr.bf16.mxu0 0
    %1235 = vmatpush1.bf16.msra.mxu0 %v1176
    %1236 = vmatprep.subr.bf16.mxu0 0
    %1237 = vmatpush1.bf16.msra.mxu0 %v1177
    %1238 = vmatprep.subr.bf16.mxu0 0
    %1239 = vmatpush1.bf16.msra.mxu0 %v1178
    %1240 = vmatprep.subr.bf16.mxu0 0
    %1241 = vmatpush1.bf16.msra.mxu0 %v1179
    %1242 = vmatprep.subr.bf16.mxu0 0
    %1243 = vmatpush1.bf16.msra.mxu0 %v1180
    %1244 = vmatprep.subr.bf16.mxu0 0
    %1245 = vmatpush1.bf16.msra.mxu0 %v1181
    %1246 = vmatprep.mubr.bf16.mxu0 %v1013
    %1247 = vmatmul.mubr.bf16.gmra.mrb[0].mxu0 %v1012
    %v1248 = vpop.f32.mrb[0].mxu0
    %v1249 = vadd.f32 %v1068, %v1248
    %v1250 = vpop.f32.mrb[0].mxu0
    %v1251 = vpop.f32.mrb[0].mxu0
    %v1252 = vpop.f32.mrb[0].mxu0
    %1253 = vdwg.mxu0
    %1254 = vmatprep.subr.bf16.mxu0 0
    %1255 = vmatpush1.bf16.msra.mxu0 %v1182
    %1256 = vmatprep.subr.bf16.mxu0 0
    %1257 = vmatpush1.bf16.msra.mxu0 %v1183
    %1258 = vmatprep.subr.bf16.mxu0 0
    %1259 = vmatpush1.bf16.msra.mxu0 %v1184
    %1260 = vmatprep.subr.bf16.mxu0 0
    %1261 = vmatpush1.bf16.msra.mxu0 %v1185
    %1262 = vmatprep.subr.bf16.mxu0 0
    %1263 = vmatpush1.bf16.msra.mxu0 %v1186
    %1264 = vmatprep.subr.bf16.mxu0 0
    %1265 = vmatpush1.bf16.msra.mxu0 %v1187
    %1266 = vmatprep.subr.bf16.mxu0 0
    %1267 = vmatpush1.bf16.msra.mxu0 %v1188
    %1268 = vmatprep.subr.bf16.mxu0 0
    %1269 = vmatpush1.bf16.msra.mxu0 %v1189
    %1270 = vmatprep.subr.bf16.mxu0 0
    %1271 = vmatpush1.bf16.msra.mxu0 0
    %1272 = vmatprep.subr.bf16.mxu0 0
    %1273 = vmatpush1.bf16.msra.mxu0 0
    %1274 = vmatprep.subr.bf16.mxu0 0
    %1275 = vmatpush1.bf16.msra.mxu0 0
    %1276 = vmatprep.subr.bf16.mxu0 0
    %1277 = vmatpush1.bf16.msra.mxu0 0
    %1278 = vmatprep.subr.bf16.mxu0 0
    %1279 = vmatpush1.bf16.msra.mxu0 0
    %1280 = vmatprep.subr.bf16.mxu0 0
    %1281 = vmatpush1.bf16.msra.mxu0 0
    %1282 = vmatprep.subr.bf16.mxu0 0
    %1283 = vmatpush1.bf16.msra.mxu0 0
    %1284 = vmatprep.subr.bf16.mxu0 0
    %1285 = vmatpush1.bf16.msra.mxu0 0
    %1286 = vmatprep.mubr.bf16.mxu0 0
    %1287 = vmatmul.mubr.bf16.gmra.mrb[0].mxu0 %v1014
    %v1288 = vpop.f32.mrb[0].mxu0
    %v1289 = vadd.f32 %v1249, %v1288
    %v1290 = vpop.f32.mrb[0].mxu0
    %v1291 = vpop.f32.mrb[0].mxu0
    %v1292 = vpop.f32.mrb[0].mxu0
    %1293 = vdwg.mxu0
    %v1294 = vld [vmem:[%s7] sm:$0x1]
    %v1296 = vlaneseq
    %v1297 = vshrl.u32 %v1296, 7
    %v1298 = vsub.s32 0, %v1297
    %v1299 = vrot.slane %v1294, %v1298
    %v1301 = vmax.f32 %v1289, %v1299
    %v1302 = vld [vmem:[%s8] sm:$0x1]
    %v1304 = vlaneseq
    %v1305 = vshrl.u32 %v1304, 7
    %v1306 = vsub.s32 0, %v1305
    %v1307 = vrot.slane %v1302, %v1306
    %v1309 = vmin.f32 %v1301, %v1307
    %vm1310 = vcmask 64512
    %1311 = vst.msk [vmem:[#allocation5] sm:$0xff] %vm1310, %v1309
    // Predicated region
    $region42: #{tpu_custom_call.1} parent=1 // pred_check
      _
    $region43: #{tpu_custom_call.1} parent=1 // pred_check_branch
      %1313 = sbr.rel (0) target = $region45
    $region44: #{tpu_custom_call.1} parent=1 // pred_region
      %s1315 = ssub.s32 128, 128
      %1316 = vsyncadd [#allocation4], %s1315
      %s1318 = sshll.u32 [#allocation5], 4
      %s1319 = int_to_ptr.vmem [resolvable:$true] %s1318
      %1321 = dma.vmem_to_hbm [thread:$0]  %s1319, 128, %s9, [#allocation4]
    $region45: #{tpu_custom_call.1} parent=1 // pred_fallthru
      _
    // Predicated region
    $region46: #{tpu_custom_call.1} parent=1 // pred_check
      _
    $region47: #{tpu_custom_call.1} parent=1 // pred_check_branch
      %1323 = sbr.rel (0) target = $region49
    $region48: #{tpu_custom_call.1} parent=1 // pred_region
      %1324 = dma.done [#allocation4], 128
    $region49: #{tpu_custom_call.1} parent=1 // pred_fallthru
      _
    %1325 = vsyncpa [#allocation3], 1
    %1326 = vsyncpa [#allocation4], 1

</llo_original>
